<compile_context>
chip_gen: v7x
topology: tpu7x:2x2x1
jax: 0.10.0
libtpu: 0.0.40
codegen_flags: <defaults>
</compile_context>

<pallas_src>
import jax
import jax.numpy as jnp
from jax.experimental import pallas as pl
from jax.experimental.pallas import tpu as pltpu


def mlp_kernel(params_ref, x_ref, o_ref):
    # Hoist the 13 parameter scalars out of SMEM once.
    w1_00 = params_ref[0]
    w1_01 = params_ref[1]
    w1_02 = params_ref[2]
    w1_10 = params_ref[3]
    w1_11 = params_ref[4]
    w1_12 = params_ref[5]
    b1_0 = params_ref[6]
    b1_1 = params_ref[7]
    b1_2 = params_ref[8]
    w2_0 = params_ref[9]
    w2_1 = params_ref[10]
    w2_2 = params_ref[11]
    b2 = params_ref[12]

    # x_ref is (rows, 256): row r holds 128 batch elements; batch element j of
    # that row sits at lanes (2j, 2j+1) = (feature0, feature1)  -- this is just
    # the natural row-major [B, 2] layout, no wrapper transpose needed.
    x = x_ref[...].astype(jnp.float32)

    # Align feature 1 onto feature 0's lane with a single lane rotate (XLU).
    # After this, even lanes hold (x0, x1) of a batch element; odd lanes hold
    # garbage that is computed harmlessly and sliced away by the wrapper.
    x0 = x
    x1 = pltpu.roll(x, shift=x.shape[1] - 1, axis=1)  # lane l <- lane l+1

    # Hidden layer (Linear(2,3) + ReLU), pure VPU broadcast FMAs.
    h0 = jnp.maximum(x0 * w1_00 + x1 * w1_10 + b1_0, 0.0)
    h1 = jnp.maximum(x0 * w1_01 + x1 * w1_11 + b1_1, 0.0)
    h2 = jnp.maximum(x0 * w1_02 + x1 * w1_12 + b1_2, 0.0)

    # Output layer (Linear(3,1)).
    y = h0 * w2_0 + h1 * w2_1 + h2 * w2_2 + b2

    # Lane-dense 256-wide store -> unmasked full-width vst.
    o_ref[...] = y.astype(o_ref.dtype)


def mlp_forward(x, w1, b1, w2, b2, *, max_rows_per_tile=1024):
    """x: [B, 2]; w1: [2, 3] (in,out); b1: [3]; w2: [3, 1] (in,out); b2: [1].

    Returns [B, 1], matching torch: output(relu(hidden(x))).
    """
    B, f_in = x.shape
    assert f_in == 2
    orig_dtype = x.dtype

    # HBM-resident I/O dtype: keep bf16 as-is (halves DMA bytes), else f32.
    io_dtype = jnp.bfloat16 if orig_dtype == jnp.bfloat16 else jnp.float32
    itemsize = jnp.dtype(io_dtype).itemsize
    row_align = 8 * (4 // itemsize)  # 8 sublanes for f32, 16 for packed bf16

    # Pack all weights/biases into one SMEM-resident f32 vector (pad to 16).
    params = jnp.concatenate(
        [
            w1.reshape(-1).astype(jnp.float32),  # [0..5]  w1[i, c] -> 3*i + c
            b1.reshape(-1).astype(jnp.float32),  # [6..8]
            w2.reshape(-1).astype(jnp.float32),  # [9..11]
            b2.reshape(-1).astype(jnp.float32),  # [12]
            jnp.zeros((3,), jnp.float32),        # pad
        ]
    )

    # ---- Tiling (all static Python ints) ----
    # One kernel "row" covers 128 batch elements (256 lanes of interleaved f0/f1).
    rows_needed = pl.cdiv(B, 128)
    total_rows = pl.cdiv(rows_needed, row_align) * row_align  # layout-min padding only

    num_steps = pl.cdiv(total_rows, max_rows_per_tile)
    if num_steps < 2 and total_rows >= 2 * row_align:
        num_steps = 2  # keep both v7x TensorCores busy; no-op on v5e/v6e
    rows_per_tile = pl.cdiv(total_rows, num_steps * row_align) * row_align
    padded_rows = num_steps * rows_per_tile
    bp = padded_rows * 128
    assert rows_per_tile % row_align == 0 and rows_per_tile <= max_rows_per_tile

    xp = x.astype(io_dtype)
    if bp != B:
        xp = jnp.pad(xp, ((0, bp - B), (0, 0)))
    # Pure row-major reshape (free): features interleaved on even/odd lanes.
    x2 = xp.reshape(padded_rows, 256)

    cost = pl.CostEstimate(
        flops=21 * bp,
        transcendentals=0,
        bytes_accessed=2 * padded_rows * 256 * itemsize + 64,
    )

    out = pl.pallas_call(
        mlp_kernel,
        out_shape=jax.ShapeDtypeStruct((padded_rows, 256), io_dtype),
        grid=(num_steps,),
        in_specs=[
            # 13 scalars -> SMEM: no padded VMEM tiles, no extra pipelined stream.
            pl.BlockSpec(memory_space=pltpu.MemorySpace.SMEM),
            pl.BlockSpec((rows_per_tile, 256), lambda i: (i, 0)),
        ],
        out_specs=pl.BlockSpec((rows_per_tile, 256), lambda i: (i, 0)),
        compiler_params=pltpu.CompilerParams(
            dimension_semantics=("parallel",),  # batch rows independent
        ),
        cost_estimate=cost,
    )(params, x2)

    # Valid result for batch element e sits at even lane -> column 0 of the
    # (bp, 2) view; this slice also drops the padded rows.
    y = out.reshape(bp, 2)[:B, 0:1]
    return y.astype(orig_dtype)


def init_params(key):
    """Deterministic init matching nn.Linear(2,3) / nn.Linear(3,1).

    PyTorch stores Linear weight as [out, in]; we return the [in, out]
    transpose so the forward is y = x @ W + b.
    """
    k1, k2, k3, k4 = jax.random.split(key, 4)
    bound1 = 1.0 / jnp.sqrt(2.0)
    w1_t = jax.random.uniform(k1, (3, 2), jnp.float32, -bound1, bound1)  # [out, in]
    b1 = jax.random.uniform(k2, (3,), jnp.float32, -bound1, bound1)
    bound2 = 1.0 / jnp.sqrt(3.0)
    w2_t = jax.random.uniform(k3, (1, 3), jnp.float32, -bound2, bound2)  # [out, in]
    b2 = jax.random.uniform(k4, (1,), jnp.float32, -bound2, bound2)
    return w1_t.T, b1, w2_t.T, b2  # [2,3], [3], [3,1], [1]


def _reference(x, w1, b1, w2, b2):
    return jnp.maximum(x @ w1 + b1, 0.0) @ w2 + b2


if __name__ == "__main__":
    key = jax.random.PRNGKey(0)
    kx, kp = jax.random.split(key)
    w1, b1, w2, b2 = init_params(kp)

    fwd = jax.jit(mlp_forward)

    # Ragged batch: exercises layout-min padding + a 2-step "parallel" grid.
    B = 3000
    x = jax.random.normal(kx, (B, 2), jnp.float32)
    out = jax.block_until_ready(fwd(x, w1, b1, w2, b2))
    ref = _reference(x, w1, b1, w2, b2)
    assert out.shape == (B, 1)
    assert jnp.allclose(out, ref, atol=1e-5, rtol=1e-5)

    # Small batch sanity check (single small tile, minimal padding).
    xs = jax.random.normal(jax.random.PRNGKey(1), (8, 2), jnp.float32)
    outs = jax.block_until_ready(fwd(xs, w1, b1, w2, b2))
    assert jnp.allclose(outs, _reference(xs, w1, b1, w2, b2), atol=1e-5, rtol=1e-5)

    # bf16 I/O path: bf16 stays the HBM/DMA format, compute upcasts to f32.
    xb = xs.astype(jnp.bfloat16)
    outb = jax.block_until_ready(fwd(xb, w1, b1, w2, b2))
    refb = _reference(xb.astype(jnp.float32), w1, b1, w2, b2)
    assert outb.dtype == jnp.bfloat16 and outb.shape == (8, 1)
    assert jnp.allclose(outb.astype(jnp.float32), refb, atol=5e-2, rtol=5e-2)

    print("KERNEL_OK")
</pallas_src>

<mosaic_0001>
module attributes {stable_mosaic.version = 11 : i64} {
  func.func @mlp_kernel(%arg0: i32, %arg1: memref<16xf32, #tpu.memory_space<smem>>, %arg2: memref<16x256xf32, #tpu.memory_space<vmem>>, %arg3: memref<16x256xf32, #tpu.memory_space<vmem>>) attributes {dimension_semantics = [#tpu.dimension_semantics<parallel>], iteration_bounds = array<i64: 2>, scalar_prefetch = 0 : i64, scratch_operands = 0 : i64, tpu.core_type = #tpu.core_type<tc>, window_params = [{transform_indices = @transform_0, window_bounds = array<i64: 16>}, {transform_indices = @transform_1, window_bounds = array<i64: 16, 256>}, {transform_indices = @transform_2, window_bounds = array<i64: 16, 256>}]} {
    %c0 = arith.constant 0 : index
    %0 = memref.load %arg1[%c0] : memref<16xf32, #tpu.memory_space<smem>>
    %c1 = arith.constant 1 : index
    %1 = memref.load %arg1[%c1] : memref<16xf32, #tpu.memory_space<smem>>
    %c2 = arith.constant 2 : index
    %2 = memref.load %arg1[%c2] : memref<16xf32, #tpu.memory_space<smem>>
    %c3 = arith.constant 3 : index
    %3 = memref.load %arg1[%c3] : memref<16xf32, #tpu.memory_space<smem>>
    %c4 = arith.constant 4 : index
    %4 = memref.load %arg1[%c4] : memref<16xf32, #tpu.memory_space<smem>>
    %c5 = arith.constant 5 : index
    %5 = memref.load %arg1[%c5] : memref<16xf32, #tpu.memory_space<smem>>
    %c6 = arith.constant 6 : index
    %6 = memref.load %arg1[%c6] : memref<16xf32, #tpu.memory_space<smem>>
    %c7 = arith.constant 7 : index
    %7 = memref.load %arg1[%c7] : memref<16xf32, #tpu.memory_space<smem>>
    %c8 = arith.constant 8 : index
    %8 = memref.load %arg1[%c8] : memref<16xf32, #tpu.memory_space<smem>>
    %c9 = arith.constant 9 : index
    %9 = memref.load %arg1[%c9] : memref<16xf32, #tpu.memory_space<smem>>
    %c10 = arith.constant 10 : index
    %10 = memref.load %arg1[%c10] : memref<16xf32, #tpu.memory_space<smem>>
    %c11 = arith.constant 11 : index
    %11 = memref.load %arg1[%c11] : memref<16xf32, #tpu.memory_space<smem>>
    %c12 = arith.constant 12 : index
    %12 = memref.load %arg1[%c12] : memref<16xf32, #tpu.memory_space<smem>>
    %c0_0 = arith.constant 0 : index
    %c0_1 = arith.constant 0 : index
    %13 = vector.load %arg2[%c0_0, %c0_1] : memref<16x256xf32, #tpu.memory_space<vmem>>, vector<16x256xf32>
    %c255_i32 = arith.constant 255 : i32
    %14 = tpu.dynamic_rotate %13 by %c255_i32 dim 1 : vector<16x256xf32>, i32 -> vector<16x256xf32>
    %15 = vector.broadcast %0 : f32 to vector<16x256xf32>
    %16 = arith.mulf %13, %15 : vector<16x256xf32>
    %17 = vector.broadcast %3 : f32 to vector<16x256xf32>
    %18 = arith.mulf %14, %17 : vector<16x256xf32>
    %19 = arith.addf %16, %18 : vector<16x256xf32>
    %20 = vector.broadcast %6 : f32 to vector<16x256xf32>
    %21 = arith.addf %19, %20 : vector<16x256xf32>
    %cst = arith.constant 0.000000e+00 : f32
    %22 = vector.broadcast %cst : f32 to vector<16x256xf32>
    %23 = arith.maximumf %21, %22 : vector<16x256xf32>
    %24 = vector.broadcast %1 : f32 to vector<16x256xf32>
    %25 = arith.mulf %13, %24 : vector<16x256xf32>
    %26 = vector.broadcast %4 : f32 to vector<16x256xf32>
    %27 = arith.mulf %14, %26 : vector<16x256xf32>
    %28 = arith.addf %25, %27 : vector<16x256xf32>
    %29 = vector.broadcast %7 : f32 to vector<16x256xf32>
    %30 = arith.addf %28, %29 : vector<16x256xf32>
    %cst_2 = arith.constant 0.000000e+00 : f32
    %31 = vector.broadcast %cst_2 : f32 to vector<16x256xf32>
    %32 = arith.maximumf %30, %31 : vector<16x256xf32>
    %33 = vector.broadcast %2 : f32 to vector<16x256xf32>
    %34 = arith.mulf %13, %33 : vector<16x256xf32>
    %35 = vector.broadcast %5 : f32 to vector<16x256xf32>
    %36 = arith.mulf %14, %35 : vector<16x256xf32>
    %37 = arith.addf %34, %36 : vector<16x256xf32>
    %38 = vector.broadcast %8 : f32 to vector<16x256xf32>
    %39 = arith.addf %37, %38 : vector<16x256xf32>
    %cst_3 = arith.constant 0.000000e+00 : f32
    %40 = vector.broadcast %cst_3 : f32 to vector<16x256xf32>
    %41 = arith.maximumf %39, %40 : vector<16x256xf32>
    %42 = vector.broadcast %9 : f32 to vector<16x256xf32>
    %43 = arith.mulf %23, %42 : vector<16x256xf32>
    %44 = vector.broadcast %10 : f32 to vector<16x256xf32>
    %45 = arith.mulf %32, %44 : vector<16x256xf32>
    %46 = arith.addf %43, %45 : vector<16x256xf32>
    %47 = vector.broadcast %11 : f32 to vector<16x256xf32>
    %48 = arith.mulf %41, %47 : vector<16x256xf32>
    %49 = arith.addf %46, %48 : vector<16x256xf32>
    %50 = vector.broadcast %12 : f32 to vector<16x256xf32>
    %51 = arith.addf %49, %50 : vector<16x256xf32>
    %c0_4 = arith.constant 0 : index
    %c0_5 = arith.constant 0 : index
    %52 = vector.load %arg3[%c0_4, %c0_5] : memref<16x256xf32, #tpu.memory_space<vmem>>, vector<16x256xf32>
    tpu.vector_store %arg3[%c0_4, %c0_5], %51 {strides = array<i32>} : memref<16x256xf32, #tpu.memory_space<vmem>>, vector<16x256xf32>,
    return
  }
  func.func @transform_0(%arg0: i32) -> i32 {
    %c0_i32 = arith.constant 0 : i32
    %c0_i32_0 = arith.constant 0 : i32
    return %c0_i32 : i32
  }
  func.func @transform_1(%arg0: i32) -> (i32, i32) {
    %c0_i32 = arith.constant 0 : i32
    %c0_i32_0 = arith.constant 0 : i32
    return %arg0, %c0_i32 : i32, i32
  }
  func.func @transform_2(%arg0: i32) -> (i32, i32) {
    %c0_i32 = arith.constant 0 : i32
    %c0_i32_0 = arith.constant 0 : i32
    return %arg0, %c0_i32 : i32, i32
  }
}

</mosaic_0001>

<llo_original>
// kernel: mlp_forward.1
$region0: #{mlp_forward.1}
  #allocation0 [shape = 'u32[]', space=smem, size = 0x4, offset = 0x4, fixed_abs, tag = 'smem constant byte address 0x4 - core index']
  #allocation1 [shape = 'u32[144,128]{1,0:T(1,128)}', space=vmem, size = 0x12000, scoped, tag = 'internal scratch']
  %s0 = inlined_call_operand.vmem [shape: f32[16], index: 0, kind: input, shape index: {}]
  %s1 = inlined_call_operand.vmem [shape: f32[32,256], index: 1, kind: input, shape index: {}]
  %s2 = inlined_call_operand.vmem [shape: f32[32,256], index: 2, kind: output, shape index: {}]
  %s3 = sld [smem:[#allocation0]]
  $region45: #{mlp_forward.1} parent=0
    _
  %s5 = ssub.s32 1, %s3
  %s6 = scalar_select 0, %s5, %s3
  $region1: #{mlp_forward.1} parent=0
    #allocation2 [shape = 'u8[512]{0}', space=smem, size = 0x200, scoped, tag = 'input window, operand 0, single buffered']
    #allocation3 [shape = 's32[2]{0}', space=sflag, size = 0x8, scoped, tag = 'scoped memory for mlp_forward.1']
    %7 = vsyncpa [#allocation3], 0
    loop: start=0, step=1, limit=4
    $region2: #{mlp_forward.1} parent=1 // loop_pre_header
      _
    $region3: #{mlp_forward.1} parent=1 // loop_header
      %s9 = sphi 0, %s13
      %p10 = scmp.ge.s32.totalorder %s9, 4
      %s17 = sphi 0, %s17
      %s19 = sphi 0, %s17
      %s20 = sphi 0, %s19
      %s34 = sphi 0, %s20
      %s40 = sphi 0, %s42
      %s43 = sphi 0, %s40
      %s44 = sphi 0, %s43
      %s60 = sphi 0, %s44
      %s66 = sphi 0, %s68
      %s69 = sphi 0, %s66
      %s70 = sphi 0, %s69
      %s86 = sphi 0, %s70
    $region4: #{mlp_forward.1} parent=1 // loop_header_branch
      %12 = sbr.rel (%p10) target = $region8
    $region5: #{mlp_forward.1} parent=1 // loop_body
      %s14 = ssub.s32 %s9, 1
      %s15 = ssub.s32 %s9, 2
      %s16 = sadd.s32 %s9, 1
      %s18 = sadd.s32 %s17, 1
      %p21 = scmp.eq.s32.totalorder %s9, 1
      %p22 = scmp.ne.s32.totalorder %s17, %s19
      %p23 = scmp.eq.s32.totalorder %s9, 0
      %p24 = por %p22, %p23
      %p25 = scmp.ne.s32.totalorder %s17, %s19
      %p26 = scmp.eq.s32.totalorder %s14, 1
      %p27 = por %p25, %p26
      %p28 = scmp.ne.s32.totalorder %s19, %s20
      %p29 = scmp.eq.s32.totalorder %s14, 0
      %p30 = por %p28, %p29
      %p31 = scmp.ne.s32.totalorder %s19, %s20
      %p32 = scmp.eq.s32.totalorder %s15, 1
      %p33 = por %p31, %p32
      %p35 = scmp.ne.s32.totalorder %s20, %s34
      %p36 = scmp.eq.s32.totalorder %s15, 0
      %p37 = por %p35, %p36
      %s38 = ssub.s32 %s9, %s16
      %p39 = scmp.eq.s32.totalorder %s38, 0
      %s41 = sadd.s32 %s40, 1
      %s42 = scalar_select %p39, %s40, %s41
      %p45 = pneg %p39
      %p46 = scmp.eq.s32.totalorder %s9, 1
      %p47 = por %p45, %p46
      %p48 = scmp.ne.s32.totalorder %s40, %s43
      %p49 = scmp.eq.s32.totalorder %s9, 0
      %p50 = por %p48, %p49
      %p51 = scmp.ne.s32.totalorder %s40, %s43
      %p52 = scmp.eq.s32.totalorder %s14, 1
      %p53 = por %p51, %p52
      %p54 = scmp.ne.s32.totalorder %s43, %s44
      %p55 = scmp.eq.s32.totalorder %s14, 0
      %p56 = por %p54, %p55
      %p57 = scmp.ne.s32.totalorder %s43, %s44
      %p58 = scmp.eq.s32.totalorder %s15, 1
      %p59 = por %p57, %p58
      %p61 = scmp.ne.s32.totalorder %s44, %s60
      %p62 = scmp.eq.s32.totalorder %s15, 0
      %p63 = por %p61, %p62
      %s64 = ssub.s32 %s9, %s16
      %p65 = scmp.eq.s32.totalorder %s64, 0
      %s67 = sadd.s32 %s66, 1
      %s68 = scalar_select %p65, %s66, %s67
      %p71 = pneg %p65
      %p72 = scmp.eq.s32.totalorder %s9, 1
      %p73 = por %p71, %p72
      %p74 = scmp.ne.s32.totalorder %s66, %s69
      %p75 = scmp.eq.s32.totalorder %s9, 0
      %p76 = por %p74, %p75
      %p77 = scmp.ne.s32.totalorder %s66, %s69
      %p78 = scmp.eq.s32.totalorder %s14, 1
      %p79 = por %p77, %p78
      %p80 = scmp.ne.s32.totalorder %s69, %s70
      %p81 = scmp.eq.s32.totalorder %s14, 0
      %p82 = por %p80, %p81
      %p83 = scmp.ne.s32.totalorder %s69, %s70
      %p84 = scmp.eq.s32.totalorder %s15, 1
      %p85 = por %p83, %p84
      %p87 = scmp.ne.s32.totalorder %s70, %s86
      %p88 = scmp.eq.s32.totalorder %s15, 0
      %p89 = por %p87, %p88
      %p90 = scmp.le.s32.totalorder 1, %s9
      %p91 = scmp.lt.s32.totalorder %s9, 3
      %p92 = pnand %p90, %p91
      %p93 = pneg %p92
      // Predicated region
      $region9: #{mlp_forward.1} parent=5 // pred_check
        _
      $region10: #{mlp_forward.1} parent=5 // pred_check_branch
        %95 = sbr.rel (%p92) target = $region12
      $region11: #{mlp_forward.1} parent=5 // pred_region
        %s96 = ssub.s32 %s9, 1
        // Predicated region
        $region13: #{mlp_forward.1} parent=11 // pred_check
          %p97 = pneg %p30
        $region14: #{mlp_forward.1} parent=11 // pred_check_branch
          %99 = sbr.rel (%p97) target = $region16
        $region15: #{mlp_forward.1} parent=11 // pred_region
          %s101 = ssub.s32 16, 16
          %102 = vsyncadd [#allocation3], %s101
          %s104 = sshll.u32 %s0, 4
          %s105 = int_to_ptr.vmem [resolvable:$true] %s104
          %107 = dma.vmem_to_smem %s105, 16, [#allocation2], [#allocation3]
        $region16: #{mlp_forward.1} parent=11 // pred_fallthru
          _
      $region12: #{mlp_forward.1} parent=5 // pred_fallthru
        _
      %p108 = scmp.lt.s32.totalorder %s9, 2
      // Predicated region
      $region17: #{mlp_forward.1} parent=5 // pred_check
        %p109 = pneg %p108
      $region18: #{mlp_forward.1} parent=5 // pred_check_branch
        %111 = sbr.rel (%p109) target = $region20
      $region19: #{mlp_forward.1} parent=5 // pred_region
        // Predicated region
        $region21: #{mlp_forward.1} parent=19 // pred_check
          %p112 = pneg %p50
        $region22: #{mlp_forward.1} parent=19 // pred_check_branch
          %114 = sbr.rel (%p112) target = $region24
        $region23: #{mlp_forward.1} parent=19 // pred_region
          %s115 = smul.u32 2, %s9
          %p116 = scmp.lt.s32.totalorder %s115, 3
          %s117 = scalar_select %p116, %s115, 3
          %s118 = smul.addr %s117, 2
          %s119 = smul.addr %s118, 8
          %s120 = scalar_lea.vmem %s1, %s119
          %s121 = smul.u32 2, %s9
        $region24: #{mlp_forward.1} parent=19 // pred_fallthru
          _
      $region20: #{mlp_forward.1} parent=5 // pred_fallthru
        _
      %p122 = scmp.le.s32.totalorder 1, %s9
      %p123 = scmp.lt.s32.totalorder %s9, 3
      %p124 = pnand %p122, %p123
      %p125 = pneg %p124
      // Predicated region
      $region25: #{mlp_forward.1} parent=5 // pred_check
        _
      $region26: #{mlp_forward.1} parent=5 // pred_check_branch
        %127 = sbr.rel (%p124) target = $region28
      $region27: #{mlp_forward.1} parent=5 // pred_region
        %s128 = ssub.s32 %s9, 1
        // Predicated region
        $region29: #{mlp_forward.1} parent=27 // pred_check
          %p129 = pneg %p30
        $region30: #{mlp_forward.1} parent=27 // pred_check_branch
          %131 = sbr.rel (%p129) target = $region32
        $region31: #{mlp_forward.1} parent=27 // pred_region
          %132 = dma.done [#allocation3], 16
        $region32: #{mlp_forward.1} parent=27 // pred_fallthru
          _
        %133 = sfence
        %p134 = pneg %p30
        %p135 = pneg %p27
        %s136 = smul.u32 2, %s14
        %p137 = scmp.lt.s32.totalorder %s136, 3
        %s138 = scalar_select %p137, %s136, 3
        %s139 = smul.addr %s138, 2
        %s140 = smul.addr %s139, 8
        %s141 = scalar_lea.vmem %s1, %s140
        %p142 = pneg %p56
        %p143 = pneg %p53
        %p144 = pneg %p82
        %p145 = pneg %p79
        %s146 = smul.u32 2, %s14
        %p147 = scmp.lt.s32.totalorder %s146, 3
        %s148 = scalar_select %p147, %s146, 3
        %s149 = smul.addr %s148, 2
        %s150 = smul.addr %s149, 8
        %s151 = scalar_lea.vmem %s2, %s150
        %s152 = smul.u32 2, %s14
        %p153 = scmp.lt.s32.totalorder %s152, 3
        %s154 = scalar_select %p153, %s152, 3
        %s155 = smul.addr %s154, 2
        %s156 = smul.addr %s155, 8
        %s157 = scalar_lea.vmem %s1, %s156
        %s158 = smul.u32 2, %s14
        %s159 = smul.u32 2, %s14
        %p160 = scmp.lt.s32.totalorder %s159, 3
        %s161 = scalar_select %p160, %s159, 3
        %s162 = smul.addr %s161, 2
        %s163 = smul.addr %s162, 8
        %s164 = scalar_lea.vmem %s2, %s163
        %s165 = smul.u32 2, %s14
        %s166 = sld [smem:[#allocation2]]
        %s167 = sld [smem:[#allocation2 + $0x1]]
        %s168 = sld [smem:[#allocation2 + $0x2]]
        %s169 = sld [smem:[#allocation2 + $0x3]]
        %s170 = sld [smem:[#allocation2 + $0x4]]
        %s171 = sld [smem:[#allocation2 + $0x5]]
        %s172 = sld [smem:[#allocation2 + $0x6]]
        %s173 = sld [smem:[#allocation2 + $0x7]]
        %s174 = sld [smem:[#allocation2 + $0x8]]
        %s175 = sld [smem:[#allocation2 + $0x9]]
        %s176 = sld [smem:[#allocation2 + $0xa]]
        %s177 = sld [smem:[#allocation2 + $0xb]]
        %s178 = sld [smem:[#allocation2 + $0xc]]
        %v179 = vld [vmem:[%s157] sm:$0xff]
        %v180 = vld [vmem:[%s157 + $0x8] sm:$0xff]
        %v181 = vld [vmem:[%s157 + $0x10] sm:$0xff]
        %v182 = vld [vmem:[%s157 + $0x18] sm:$0xff]
        %183 = vrot.lane.b32.xlu0 %v179, 127
        %v184 = vpop.permute.xlu0 %183
        %185 = vrot.lane.b32.xlu0 %v181, 127
        %v186 = vpop.permute.xlu0 %185
        %187 = vrot.lane.b32.xlu0 %v180, 127
        %v188 = vpop.permute.xlu0 %187
        %189 = vrot.lane.b32.xlu0 %v182, 127
        %v190 = vpop.permute.xlu0 %189
        %v191 = vlaneseq
        %v192 = vand.u32 %v191, 127
        %vm193 = vcmp.lt.s32.totalorder %v192, 127
        %v194 = vsel %vm193, %v184, %v188
        %v195 = vsel %vm193, %v186, %v190
        %v196 = vsel %vm193, %v188, %v184
        %v197 = vsel %vm193, %v190, %v186
        %v198 = vstv %s166
        %v199 = vmul.f32 %v179, %v198
        %v200 = vmul.f32 %v180, %v198
        %v201 = vmul.f32 %v181, %v198
        %v202 = vmul.f32 %v182, %v198
        %v203 = vstv %s169
        %v204 = vmul.f32 %v194, %v203
        %v205 = vmul.f32 %v196, %v203
        %v206 = vmul.f32 %v195, %v203
        %v207 = vmul.f32 %v197, %v203
        %v208 = vadd.f32 %v199, %v204
        %v209 = vadd.f32 %v200, %v205
        %v210 = vadd.f32 %v201, %v206
        %v211 = vadd.f32 %v202, %v207
        %v212 = vstv %s172
        %v213 = vadd.f32 %v208, %v212
        %v214 = vadd.f32 %v209, %v212
        %v215 = vadd.f32 %v210, %v212
        %v216 = vadd.f32 %v211, %v212
        %v217 = vmax.f32 %v213, 0.0
        %v218 = vmax.f32 %v214, 0.0
        %v219 = vmax.f32 %v215, 0.0
        %v220 = vmax.f32 %v216, 0.0
        %v221 = vstv %s167
        %v222 = vmul.f32 %v179, %v221
        %v223 = vmul.f32 %v180, %v221
        %v224 = vmul.f32 %v181, %v221
        %v225 = vmul.f32 %v182, %v221
        %v226 = vstv %s170
        %v227 = vmul.f32 %v194, %v226
        %v228 = vmul.f32 %v196, %v226
        %v229 = vmul.f32 %v195, %v226
        %v230 = vmul.f32 %v197, %v226
        %v231 = vadd.f32 %v222, %v227
        %v232 = vadd.f32 %v223, %v228
        %v233 = vadd.f32 %v224, %v229
        %v234 = vadd.f32 %v225, %v230
        %v235 = vstv %s173
        %v236 = vadd.f32 %v231, %v235
        %v237 = vadd.f32 %v232, %v235
        %v238 = vadd.f32 %v233, %v235
        %v239 = vadd.f32 %v234, %v235
        %v240 = vmax.f32 %v236, 0.0
        %v241 = vmax.f32 %v237, 0.0
        %v242 = vmax.f32 %v238, 0.0
        %v243 = vmax.f32 %v239, 0.0
        %v244 = vstv %s168
        %v245 = vmul.f32 %v179, %v244
        %v246 = vmul.f32 %v180, %v244
        %v247 = vmul.f32 %v181, %v244
        %v248 = vmul.f32 %v182, %v244
        %v249 = vstv %s171
        %v250 = vmul.f32 %v194, %v249
        %v251 = vmul.f32 %v196, %v249
        %v252 = vmul.f32 %v195, %v249
        %v253 = vmul.f32 %v197, %v249
        %v254 = vadd.f32 %v245, %v250
        %v255 = vadd.f32 %v246, %v251
        %v256 = vadd.f32 %v247, %v252
        %v257 = vadd.f32 %v248, %v253
        %v258 = vstv %s174
        %v259 = vadd.f32 %v254, %v258
        %v260 = vadd.f32 %v255, %v258
        %v261 = vadd.f32 %v256, %v258
        %v262 = vadd.f32 %v257, %v258
        %v263 = vmax.f32 %v259, 0.0
        %v264 = vmax.f32 %v260, 0.0
        %v265 = vmax.f32 %v261, 0.0
        %v266 = vmax.f32 %v262, 0.0
        %v267 = vstv %s175
        %v268 = vmul.f32 %v217, %v267
        %v269 = vmul.f32 %v218, %v267
        %v270 = vmul.f32 %v219, %v267
        %v271 = vmul.f32 %v220, %v267
        %v272 = vstv %s176
        %v273 = vmul.f32 %v240, %v272
        %v274 = vmul.f32 %v241, %v272
        %v275 = vmul.f32 %v242, %v272
        %v276 = vmul.f32 %v243, %v272
        %v277 = vadd.f32 %v268, %v273
        %v278 = vadd.f32 %v269, %v274
        %v279 = vadd.f32 %v270, %v275
        %v280 = vadd.f32 %v271, %v276
        %v281 = vstv %s177
        %v282 = vmul.f32 %v263, %v281
        %v283 = vmul.f32 %v264, %v281
        %v284 = vmul.f32 %v265, %v281
        %v285 = vmul.f32 %v266, %v281
        %v286 = vadd.f32 %v277, %v282
        %v287 = vadd.f32 %v278, %v283
        %v288 = vadd.f32 %v279, %v284
        %v289 = vadd.f32 %v280, %v285
        %v290 = vstv %s178
        %v291 = vadd.f32 %v286, %v290
        %v292 = vadd.f32 %v287, %v290
        %v293 = vadd.f32 %v288, %v290
        %v294 = vadd.f32 %v289, %v290
        %295 = vst [vmem:[%s164] sm:$0xff] %v291
        %296 = vst [vmem:[%s164 + $0x8] sm:$0xff] %v292
        %297 = vst [vmem:[%s164 + $0x10] sm:$0xff] %v293
        %298 = vst [vmem:[%s164 + $0x18] sm:$0xff] %v294
        %s299 = smul.u32 2, %s14
        %p300 = scmp.lt.s32.totalorder %s299, 3
        %s301 = scalar_select %p300, %s299, 3
        %s302 = smul.addr %s301, 2
        %s303 = smul.addr %s302, 8
        %s304 = scalar_lea.vmem %s2, %s303
        // Predicated region
        $region33: #{mlp_forward.1} parent=27 // pred_check
          %p305 = pneg %p79
        $region34: #{mlp_forward.1} parent=27 // pred_check_branch
          %307 = sbr.rel (%p305) target = $region36
        $region35: #{mlp_forward.1} parent=27 // pred_region
          %s308 = smul.u32 2, %s14
        $region36: #{mlp_forward.1} parent=27 // pred_fallthru
          _
      $region28: #{mlp_forward.1} parent=5 // pred_fallthru
        _
      %p309 = scmp.le.s32.totalorder 2, %s9
      // Predicated region
      $region37: #{mlp_forward.1} parent=5 // pred_check
        %p310 = pneg %p309
      $region38: #{mlp_forward.1} parent=5 // pred_check_branch
        %312 = sbr.rel (%p310) target = $region40
      $region39: #{mlp_forward.1} parent=5 // pred_region
        %s313 = ssub.s32 %s9, 2
        // Predicated region
        $region41: #{mlp_forward.1} parent=39 // pred_check
          %p314 = pneg %p85
        $region42: #{mlp_forward.1} parent=39 // pred_check_branch
          %316 = sbr.rel (%p314) target = $region44
        $region43: #{mlp_forward.1} parent=39 // pred_region
          %s317 = smul.u32 2, %s15
          %p318 = scmp.lt.s32.totalorder %s317, 3
          %s319 = scalar_select %p318, %s317, 3
          %s320 = smul.addr %s319, 2
          %s321 = smul.addr %s320, 8
          %s322 = scalar_lea.vmem %s2, %s321
        $region44: #{mlp_forward.1} parent=39 // pred_fallthru
          _
      $region40: #{mlp_forward.1} parent=5 // pred_fallthru
        _
    $region6: #{mlp_forward.1} parent=1 // loop_footer
      %s13 = sadd.s32 1, %s9
    $region7: #{mlp_forward.1} parent=1 // loop_footer_branch
      %8 = sbr.rel target = $region3
    $region8: #{mlp_forward.1} parent=1 // loop_exit
      _
    %323 = vsyncpa [#allocation3], 1
    %s324 = scalar_lea.sflag [#allocation3], 1
    %325 = vsyncpa %s324, 1

</llo_original>
